<compile_context>
chip_gen: v6e
topology: v6e:2x2x1
jax: 0.10.0
libtpu: 0.0.40
codegen_flags: <defaults>
</compile_context>

<pallas_src>
import math

import jax
import jax.numpy as jnp
from jax.experimental import pallas as pl
from jax.experimental.pallas import tpu as pltpu

BN_EPS = 1e-5   # PyTorch BatchNorm1d default eps
GIN_EPS = 0.0   # PyG GINConv default eps (train_eps=False)


def _round_up(x: int, m: int) -> int:
    return (x + m - 1) // m * m


# --------------------------------------------------------------------------- #
# Pallas kernel: one fused GIN layer (tiled over dst rows x src reduction)
# --------------------------------------------------------------------------- #
def _gin_layer_kernel(a_ref, xs_ref, w0_ref, vh_ref, w1_ref, vo_ref,
                      out_ref, acc_ref):
    """Grid = (row_blocks, k_blocks).

    a_ref  : (TM, TK)    bf16  adjacency tile A'[dst_block, src_block]
                               (self-term (1+eps) already folded onto the diagonal)
    xs_ref : (TK, Cin)   bf16  source-node features (k-indexed)
    w0_ref : (Cin, H)    bf16  MLP Linear0 weight
    vh_ref : (8, H)      f32   row0 = b0, row1 = BN scale, row2 = BN shift
    w1_ref : (H, Cout)   bf16  MLP Linear1 weight (next inter-layer BN folded in)
    vo_ref : (8, Cout)   f32   row0 = b1 (next inter-layer BN folded in)
    out_ref: (TM, Cout)
    acc_ref: (TM, Cin)   f32   aggregation accumulator scratch
    """
    k = pl.program_id(1)

    @pl.when(k == 0)
    def _init():
        acc_ref[...] = jnp.zeros_like(acc_ref)

    # GINConv aggregation + self-term in one MXU matmul (bf16 ops, f32 acc):
    #   acc = sum_k A'[i, k] @ x[k]  ==  (1+eps)*x_i + sum_{j in N(i)} x_j
    acc_ref[...] += jnp.dot(a_ref[...], xs_ref[...],
                            preferred_element_type=jnp.float32)

    @pl.when(k == pl.num_programs(1) - 1)
    def _epilogue():
        # update_net MLP layer 0: Linear -> ReLU -> BatchNorm1d (folded scale/shift).
        h1 = jnp.dot(acc_ref[...].astype(jnp.bfloat16), w0_ref[...],
                     preferred_element_type=jnp.float32) + vh_ref[0:1, :]
        h1 = jnp.maximum(h1, 0.0)
        h1 = h1 * vh_ref[1:2, :] + vh_ref[2:3, :]

        # update_net MLP layer 1: Linear (inter-layer BN already folded into w1/b1).
        out = jnp.dot(h1.astype(jnp.bfloat16), w1_ref[...],
                      preferred_element_type=jnp.float32) + vo_ref[0:1, :]
        out_ref[...] = out.astype(out_ref.dtype)


def gin_layer(x_pad, adj_pad, lp, out_dtype, tm, tk):
    """One fused GIN layer as a tiled, double-buffered pallas_call."""
    n_pad, cin_p = x_pad.shape
    h_p = lp["w0"].shape[1]
    cout_p = lp["w1"].shape[1]
    grid = (n_pad // tm, n_pad // tk)

    flops = (2 * n_pad * n_pad * cin_p          # A' @ x
             + 2 * n_pad * cin_p * h_p          # Linear0
             + 2 * n_pad * h_p * cout_p)        # Linear1
    bytes_accessed = (n_pad * n_pad * 2                      # A' (bf16)
                      + grid[0] * n_pad * cin_p * 2          # x re-streamed per row-block
                      + (cin_p * h_p + h_p * cout_p) * 2     # weights (bf16)
                      + 8 * (h_p + cout_p) * 4               # packed bias/BN vectors
                      + n_pad * cout_p * jnp.dtype(out_dtype).itemsize)

    return pl.pallas_call(
        _gin_layer_kernel,
        out_shape=jax.ShapeDtypeStruct((n_pad, cout_p), out_dtype),
        grid_spec=pltpu.PrefetchScalarGridSpec(
            num_scalar_prefetch=0,
            grid=grid,
            in_specs=[
                pl.BlockSpec((tm, tk), lambda i, k: (i, k)),        # A' tile
                pl.BlockSpec((tk, cin_p), lambda i, k: (k, 0)),     # x (source rows)
                pl.BlockSpec((cin_p, h_p), lambda i, k: (0, 0)),    # w0
                pl.BlockSpec((8, h_p), lambda i, k: (0, 0)),        # b0 / BN scale / shift
                pl.BlockSpec((h_p, cout_p), lambda i, k: (0, 0)),   # w1 (BN folded)
                pl.BlockSpec((8, cout_p), lambda i, k: (0, 0)),     # b1 (BN folded)
            ],
            out_specs=pl.BlockSpec((tm, cout_p), lambda i, k: (i, 0)),
            scratch_shapes=[pltpu.VMEM((tm, cin_p), jnp.float32)],
        ),
        compiler_params=pltpu.CompilerParams(
            dimension_semantics=("parallel", "arbitrary"),
            vmem_limit_bytes=48 * 1024 * 1024,
        ),
        cost_estimate=pl.CostEstimate(flops=flops, transcendentals=0,
                                      bytes_accessed=bytes_accessed),
    )(adj_pad, x_pad, lp["w0"], lp["vh"], lp["w1"], lp["vo"])


# --------------------------------------------------------------------------- #
# Glue: parameter init, BN folding + channel padding, adjacency, layer loop
# --------------------------------------------------------------------------- #
def _init_linear(key, fan_in, fan_out):
    kw, kb = jax.random.split(key)
    bound = 1.0 / math.sqrt(fan_in)
    w = jax.random.uniform(kw, (fan_in, fan_out), jnp.float32, -bound, bound)
    b = jax.random.uniform(kb, (fan_out,), jnp.float32, -bound, bound)
    return w, b


def _init_bn(key, c):
    k0, k1, k2, k3 = jax.random.split(key, 4)
    gamma = 1.0 + 0.1 * jax.random.normal(k0, (c,), jnp.float32)
    beta = 0.1 * jax.random.normal(k1, (c,), jnp.float32)
    mean = 0.1 * jax.random.normal(k2, (c,), jnp.float32)
    var = 1.0 + 0.1 * jnp.abs(jax.random.normal(k3, (c,), jnp.float32))
    return gamma, beta, mean, var


def init_gin_raw_params(key, in_channels, hidden_channels, out_channels, n_layers):
    dims = ([(in_channels, hidden_channels, hidden_channels)]
            + [(hidden_channels, hidden_channels, hidden_channels)] * (n_layers - 2)
            + [(hidden_channels, hidden_channels, out_channels)])
    layers, inter_bns = [], []
    for i, (ci, ch, co) in enumerate(dims):
        key, k0, k1, k2, k3 = jax.random.split(key, 5)
        w0, b0 = _init_linear(k0, ci, ch)
        w1, b1 = _init_linear(k1, ch, co)
        g0, bt0, m0, v0 = _init_bn(k2, ch)
        layers.append(dict(w0=w0, b0=b0, w1=w1, b1=b1,
                           g0=g0, bt0=bt0, m0=m0, v0=v0))
        if i < n_layers - 1:       # self.bns[i] is applied after layer i's output
            inter_bns.append(_init_bn(k3, co))
    return layers, inter_bns


def _bn_fold(gamma, beta, mean, var):
    scale = gamma * jax.lax.rsqrt(var + BN_EPS)
    return scale, beta - mean * scale


def prepare_kernel_params(raw_layers, inter_bns):
    """Pad channels to 128 lanes, cast weights to bf16 and fold inference-mode
    BatchNorms to per-channel scale/shift (exact eval()-mode algebra)."""
    kparams = []
    for j, rp in enumerate(raw_layers):
        ci, ch = rp["w0"].shape
        co = rp["w1"].shape[1]
        ci_p, ch_p, co_p = _round_up(ci, 128), _round_up(ch, 128), _round_up(co, 128)

        s0, t0 = _bn_fold(rp["g0"], rp["bt0"], rp["m0"], rp["v0"])   # MLP-internal BN
        if j < len(raw_layers) - 1:
            ps, pt = _bn_fold(*inter_bns[j])       # inter-layer BN, folded forward
        else:
            ps = jnp.ones((co,), jnp.float32)
            pt = jnp.zeros((co,), jnp.float32)
        w1f = rp["w1"] * ps[None, :]
        b1f = rp["b1"] * ps + pt

        w0_p = jnp.zeros((ci_p, ch_p), jnp.float32).at[:ci, :ch].set(rp["w0"])
        w1_p = jnp.zeros((ch_p, co_p), jnp.float32).at[:ch, :co].set(w1f)
        vh = jnp.zeros((8, ch_p), jnp.float32)
        vh = vh.at[0, :ch].set(rp["b0"]).at[1, :ch].set(s0).at[2, :ch].set(t0)
        vo = jnp.zeros((8, co_p), jnp.float32).at[0, :co].set(b1f)

        kparams.append(dict(w0=w0_p.astype(jnp.bfloat16), vh=vh,
                            w1=w1_p.astype(jnp.bfloat16), vo=vo))
    return kparams


def edge_index_to_gin_adj(edge_index, num_nodes):
    """A'[dst, src] = #edges src->dst, plus (1+eps) on the diagonal, so that
    A' @ x == (1+eps)*x_i + sum_{j in N(i)} x_j (the GINConv update input)."""
    src, dst = edge_index[0], edge_index[1]
    adj = jnp.zeros((num_nodes, num_nodes), jnp.float32)
    adj = adj.at[dst, src].add(1.0)
    adj = adj + (1.0 + GIN_EPS) * jnp.eye(num_nodes, dtype=jnp.float32)
    return adj


def gin_forward(kparams, x, edge_index, out_channels, tm=256, tk=512):
    n = x.shape[0]
    # Shrink tiles for small graphs while keeping (8, 128) alignment.
    tm = min(tm, _round_up(n, 8))
    tk = min(tk, _round_up(n, 128))
    n_pad = _round_up(n, math.lcm(tm, tk))

    adj = edge_index_to_gin_adj(edge_index, n)
    adj_p = jnp.zeros((n_pad, n_pad), jnp.bfloat16).at[:n, :n].set(
        adj.astype(jnp.bfloat16))   # edge counts are small integers, exact in bf16

    cin_p = kparams[0]["w0"].shape[0]
    h = jnp.zeros((n_pad, cin_p), jnp.bfloat16).at[:n, :x.shape[1]].set(
        x.astype(jnp.bfloat16))

    for li, lp in enumerate(kparams):
        # Dropout before the inter-layer BN is identity in inference mode and the
        # inter-layer BN itself is folded into the previous layer's Linear1.
        last = li == len(kparams) - 1
        h = gin_layer(h, adj_p, lp, jnp.float32 if last else jnp.bfloat16, tm, tk)
    return h[:n, :out_channels]


def gin_reference(kparams, x, edge_index, out_channels):
    """Plain-JAX reference using the same bf16/f32 casting pattern as the kernel."""
    n = x.shape[0]
    adj = edge_index_to_gin_adj(edge_index, n).astype(jnp.bfloat16)
    cin_p = kparams[0]["w0"].shape[0]
    h = jnp.zeros((n, cin_p), jnp.bfloat16).at[:, :x.shape[1]].set(
        x.astype(jnp.bfloat16))
    for li, lp in enumerate(kparams):
        z = jnp.dot(adj, h, preferred_element_type=jnp.float32)
        z1 = jnp.dot(z.astype(jnp.bfloat16), lp["w0"],
                     preferred_element_type=jnp.float32) + lp["vh"][0:1]
        z1 = jnp.maximum(z1, 0.0)
        z1 = z1 * lp["vh"][1:2] + lp["vh"][2:3]
        out = jnp.dot(z1.astype(jnp.bfloat16), lp["w1"],
                      preferred_element_type=jnp.float32) + lp["vo"][0:1]
        h = out if li == len(kparams) - 1 else out.astype(jnp.bfloat16)
    return h[:, :out_channels]


# --------------------------------------------------------------------------- #
# Demo
# --------------------------------------------------------------------------- #
if __name__ == "__main__":
    N = 64            # number of graph nodes
    E = 256           # number of edges
    IN_CH = 16
    HIDDEN_CH = 32
    OUT_CH = 8
    N_LAYERS = 3

    key = jax.random.PRNGKey(0)
    k_x, k_e, k_p = jax.random.split(key, 3)

    x = jax.random.normal(k_x, (N, IN_CH), jnp.float32)
    edge_index = jax.random.randint(k_e, (2, E), 0, N, jnp.int32)

    raw_layers, inter_bns = init_gin_raw_params(k_p, IN_CH, HIDDEN_CH, OUT_CH, N_LAYERS)
    kparams = prepare_kernel_params(raw_layers, inter_bns)

    out = gin_forward(kparams, x, edge_index, OUT_CH)
    out = jax.block_until_ready(out)
    assert out.shape == (N, OUT_CH), out.shape
    assert bool(jnp.all(jnp.isfinite(out)))

    ref = gin_reference(kparams, x, edge_index, OUT_CH)
    err = float(jnp.max(jnp.abs(out - ref)))
    assert err < 5e-2, f"kernel vs reference mismatch: {err}"

    print("KERNEL_OK")
</pallas_src>

<mosaic_0001>
module attributes {stable_mosaic.version = 11 : i64} {
  func.func @_gin_layer_kernel(%arg0: i32, %arg1: i32, %arg2: memref<64x128xbf16, #tpu.memory_space<vmem>>, %arg3: memref<128x128xbf16, #tpu.memory_space<vmem>>, %arg4: memref<128x128xbf16, #tpu.memory_space<vmem>>, %arg5: memref<8x128xf32, #tpu.memory_space<vmem>>, %arg6: memref<128x128xbf16, #tpu.memory_space<vmem>>, %arg7: memref<8x128xf32, #tpu.memory_space<vmem>>, %arg8: memref<64x128xbf16, #tpu.memory_space<vmem>>, %arg9: memref<64x128xf32, #tpu.memory_space<vmem>>) attributes {dimension_semantics = [#tpu.dimension_semantics<parallel>, #tpu.dimension_semantics<arbitrary>], iteration_bounds = array<i64: 2, 1>, scalar_prefetch = 0 : i64, scratch_operands = 1 : i64, tpu.core_type = #tpu.core_type<tc>, window_params = [{transform_indices = @transform_0, window_bounds = array<i64: 64, 128>}, {transform_indices = @transform_1, window_bounds = array<i64: 128, 128>}, {pipeline_mode = #tpu.pipeline_mode<synchronous>, transform_indices = @transform_2, window_bounds = array<i64: 128, 128>}, {pipeline_mode = #tpu.pipeline_mode<synchronous>, transform_indices = @transform_3, window_bounds = array<i64: 8, 128>}, {pipeline_mode = #tpu.pipeline_mode<synchronous>, transform_indices = @transform_4, window_bounds = array<i64: 128, 128>}, {pipeline_mode = #tpu.pipeline_mode<synchronous>, transform_indices = @transform_5, window_bounds = array<i64: 8, 128>}, {transform_indices = @transform_6, window_bounds = array<i64: 64, 128>}]} {
    %c0_i32 = arith.constant 0 : i32
    %0 = arith.cmpi eq, %arg1, %c0_i32 : i32
    %1 = arith.extui %0 : i1 to i32
    %c0_i32_0 = arith.constant 0 : i32
    %2 = arith.cmpi ne, %1, %c0_i32_0 : i32
    scf.if %2 {
      %cst_10 = arith.constant 0.000000e+00 : f32
      %12 = vector.broadcast %cst_10 : f32 to vector<64x128xf32>
      %c0_11 = arith.constant 0 : index
      %c0_12 = arith.constant 0 : index
      %13 = vector.load %arg9[%c0_11, %c0_12] : memref<64x128xf32, #tpu.memory_space<vmem>>, vector<64x128xf32>
      tpu.vector_store %arg9[%c0_11, %c0_12], %12 {strides = array<i32>} : memref<64x128xf32, #tpu.memory_space<vmem>>, vector<64x128xf32>,
    } else {
    }
    %c0 = arith.constant 0 : index
    %c0_1 = arith.constant 0 : index
    %3 = vector.load %arg9[%c0, %c0_1] : memref<64x128xf32, #tpu.memory_space<vmem>>, vector<64x128xf32>
    %c0_2 = arith.constant 0 : index
    %c0_3 = arith.constant 0 : index
    %4 = vector.load %arg2[%c0_2, %c0_3] : memref<64x128xbf16, #tpu.memory_space<vmem>>, vector<64x128xbf16>
    %c0_4 = arith.constant 0 : index
    %c0_5 = arith.constant 0 : index
    %5 = vector.load %arg3[%c0_4, %c0_5] : memref<128x128xbf16, #tpu.memory_space<vmem>>, vector<128x128xbf16>
    %cst = arith.constant dense<0.000000e+00> : vector<64x128xf32>
    %6 = tpu.matmul %4, %5, %cst {dimension_numbers = #tpu.dot_dimension_numbers<[1], [0], [0], [1], [0, 0, 1, 1], [], []>} : vector<64x128xbf16>, vector<128x128xbf16>, vector<64x128xf32> -> vector<64x128xf32>
    %7 = arith.addf %3, %6 : vector<64x128xf32>
    %c0_6 = arith.constant 0 : index
    %c0_7 = arith.constant 0 : index
    %8 = vector.load %arg9[%c0_6, %c0_7] : memref<64x128xf32, #tpu.memory_space<vmem>>, vector<64x128xf32>
    tpu.vector_store %arg9[%c0_6, %c0_7], %7 {strides = array<i32>} : memref<64x128xf32, #tpu.memory_space<vmem>>, vector<64x128xf32>,
    %c0_i32_8 = arith.constant 0 : i32
    %9 = arith.cmpi eq, %arg1, %c0_i32_8 : i32
    %10 = arith.extui %9 : i1 to i32
    %c0_i32_9 = arith.constant 0 : i32
    %11 = arith.cmpi ne, %10, %c0_i32_9 : i32
    scf.if %11 {
      %c0_10 = arith.constant 0 : index
      %c0_11 = arith.constant 0 : index
      %12 = vector.load %arg9[%c0_10, %c0_11] : memref<64x128xf32, #tpu.memory_space<vmem>>, vector<64x128xf32>
      %13 = arith.truncf %12 : vector<64x128xf32> to vector<64x128xbf16>
      %c0_12 = arith.constant 0 : index
      %c0_13 = arith.constant 0 : index
      %14 = vector.load %arg4[%c0_12, %c0_13] : memref<128x128xbf16, #tpu.memory_space<vmem>>, vector<128x128xbf16>
      %cst_14 = arith.constant dense<0.000000e+00> : vector<64x128xf32>
      %15 = tpu.matmul %13, %14, %cst_14 {dimension_numbers = #tpu.dot_dimension_numbers<[1], [0], [0], [1], [0, 0, 1, 1], [], []>} : vector<64x128xbf16>, vector<128x128xbf16>, vector<64x128xf32> -> vector<64x128xf32>
      %c0_15 = arith.constant 0 : index
      %c0_16 = arith.constant 0 : index
      %16 = vector.load %arg5[%c0_15, %c0_16] : memref<8x128xf32, #tpu.memory_space<vmem>>, vector<1x128xf32>
      %17 = vector.broadcast %16 : vector<1x128xf32> to vector<64x128xf32>
      %18 = arith.addf %15, %17 : vector<64x128xf32>
      %cst_17 = arith.constant 0.000000e+00 : f32
      %19 = vector.broadcast %cst_17 : f32 to vector<64x128xf32>
      %20 = arith.maximumf %18, %19 : vector<64x128xf32>
      %c1 = arith.constant 1 : index
      %c0_18 = arith.constant 0 : index
      %21 = vector.load %arg5[%c1, %c0_18] : memref<8x128xf32, #tpu.memory_space<vmem>>, vector<1x128xf32>
      %22 = vector.broadcast %21 : vector<1x128xf32> to vector<64x128xf32>
      %23 = arith.mulf %20, %22 : vector<64x128xf32>
      %c2 = arith.constant 2 : index
      %c0_19 = arith.constant 0 : index
      %24 = vector.load %arg5[%c2, %c0_19] : memref<8x128xf32, #tpu.memory_space<vmem>>, vector<1x128xf32>
      %25 = vector.broadcast %24 : vector<1x128xf32> to vector<64x128xf32>
      %26 = arith.addf %23, %25 : vector<64x128xf32>
      %27 = arith.truncf %26 : vector<64x128xf32> to vector<64x128xbf16>
      %c0_20 = arith.constant 0 : index
      %c0_21 = arith.constant 0 : index
      %28 = vector.load %arg6[%c0_20, %c0_21] : memref<128x128xbf16, #tpu.memory_space<vmem>>, vector<128x128xbf16>
      %cst_22 = arith.constant dense<0.000000e+00> : vector<64x128xf32>
      %29 = tpu.matmul %27, %28, %cst_22 {dimension_numbers = #tpu.dot_dimension_numbers<[1], [0], [0], [1], [0, 0, 1, 1], [], []>} : vector<64x128xbf16>, vector<128x128xbf16>, vector<64x128xf32> -> vector<64x128xf32>
      %c0_23 = arith.constant 0 : index
      %c0_24 = arith.constant 0 : index
      %30 = vector.load %arg7[%c0_23, %c0_24] : memref<8x128xf32, #tpu.memory_space<vmem>>, vector<1x128xf32>
      %31 = vector.broadcast %30 : vector<1x128xf32> to vector<64x128xf32>
      %32 = arith.addf %29, %31 : vector<64x128xf32>
      %33 = arith.truncf %32 : vector<64x128xf32> to vector<64x128xbf16>
      %c0_25 = arith.constant 0 : index
      %c0_26 = arith.constant 0 : index
      %34 = vector.load %arg8[%c0_25, %c0_26] : memref<64x128xbf16, #tpu.memory_space<vmem>>, vector<64x128xbf16>
      tpu.vector_store %arg8[%c0_25, %c0_26], %33 {strides = array<i32>} : memref<64x128xbf16, #tpu.memory_space<vmem>>, vector<64x128xbf16>,
    } else {
    }
    return
  }
  func.func @transform_0(%arg0: i32, %arg1: i32) -> (i32, i32) {
    %c0_i32 = arith.constant 0 : i32
    return %arg0, %arg1 : i32, i32
  }
  func.func @transform_1(%arg0: i32, %arg1: i32) -> (i32, i32) {
    %c0_i32 = arith.constant 0 : i32
    %c0_i32_0 = arith.constant 0 : i32
    return %arg1, %c0_i32 : i32, i32
  }
  func.func @transform_2(%arg0: i32, %arg1: i32) -> (i32, i32) {
    %c0_i32 = arith.constant 0 : i32
    %c0_i32_0 = arith.constant 0 : i32
    %c0_i32_1 = arith.constant 0 : i32
    return %c0_i32, %c0_i32_0 : i32, i32
  }
  func.func @transform_3(%arg0: i32, %arg1: i32) -> (i32, i32) {
    %c0_i32 = arith.constant 0 : i32
    %c0_i32_0 = arith.constant 0 : i32
    %c0_i32_1 = arith.constant 0 : i32
    return %c0_i32, %c0_i32_0 : i32, i32
  }
  func.func @transform_4(%arg0: i32, %arg1: i32) -> (i32, i32) {
    %c0_i32 = arith.constant 0 : i32
    %c0_i32_0 = arith.constant 0 : i32
    %c0_i32_1 = arith.constant 0 : i32
    return %c0_i32, %c0_i32_0 : i32, i32
  }
  func.func @transform_5(%arg0: i32, %arg1: i32) -> (i32, i32) {
    %c0_i32 = arith.constant 0 : i32
    %c0_i32_0 = arith.constant 0 : i32
    %c0_i32_1 = arith.constant 0 : i32
    return %c0_i32, %c0_i32_0 : i32, i32
  }
  func.func @transform_6(%arg0: i32, %arg1: i32) -> (i32, i32) {
    %c0_i32 = arith.constant 0 : i32
    %c0_i32_0 = arith.constant 0 : i32
    return %arg0, %c0_i32 : i32, i32
  }
}

</mosaic_0001>

<llo_original>
// kernel: tpu_custom_call.1
$region0: #{tpu_custom_call.1}
  #allocation0 [shape = 'u32[]', space=smem, size = 0x4, offset = 0x4, fixed_abs, tag = 'smem constant byte address 0x4 - core index']
  #allocation1 [shape = 'u32[144,128]{1,0:T(1,128)}', space=vmem, size = 0x12000, scoped, tag = 'internal scratch']
  #allocation2 [shape = 'f32[64,128]{1,0:T(8,128)}', space=vmem, size = 0x8000, scoped, tag = 'scratch operand']
  %s0 = inlined_call_operand.hbm [shape: bf16[128,128], index: 0, kind: input, shape index: {}]
  %s1 = inlined_call_operand.hbm [shape: bf16[128,128], index: 1, kind: input, shape index: {}]
  %s2 = inlined_call_operand.hbm [shape: bf16[128,128], index: 2, kind: input, shape index: {}]
  %s3 = inlined_call_operand.hbm [shape: f32[8,128], index: 3, kind: input, shape index: {}]
  %s4 = inlined_call_operand.hbm [shape: bf16[128,128], index: 4, kind: input, shape index: {}]
  %s5 = inlined_call_operand.vmem [shape: f32[8,128], index: 5, kind: input, shape index: {}]
  %s6 = inlined_call_operand.hbm [shape: bf16[128,128], index: 6, kind: output, shape index: {}]
  %s7 = sld [smem:[#allocation0]]
  $region85: #{tpu_custom_call.1} parent=0
    _
  %s9 = ssub.s32 1, %s7
  %s10 = scalar_select 0, %s9, %s7
  $region1: #{tpu_custom_call.1} parent=0
    #allocation3 [shape = 'u8[32768]{0}', space=vmem, size = 0x8000, scoped, tag = 'input window, operand 0']
    #allocation4 [shape = 's32[2]{0}', space=sflag, size = 0x8, scoped, tag = 'scoped memory for tpu_custom_call.1']
    #allocation5 [shape = 's32[2]{0}', space=sflag, size = 0x8, scoped, tag = 'scoped memory for tpu_custom_call.1']
    #allocation6 [shape = 'u8[32768]{0}', space=vmem, size = 0x8000, scoped, tag = 'input window, operand 1, single buffered']
    #allocation7 [shape = 's32[1]{0}', space=sflag, size = 0x4, scoped, tag = 'scoped memory for tpu_custom_call.1']
    #allocation8 [shape = 'u8[32768]{0}', space=vmem, size = 0x8000, scoped, tag = 'input window, operand 2, single buffered']
    #allocation9 [shape = 'u8[4096]{0}', space=vmem, size = 0x1000, scoped, tag = 'input window, operand 3, single buffered']
    #allocation10 [shape = 's32[1]{0}', space=sflag, size = 0x4, scoped, tag = 'scoped memory for tpu_custom_call.1']
    #allocation11 [shape = 'u8[32768]{0}', space=vmem, size = 0x8000, scoped, tag = 'input window, operand 4, single buffered']
    #allocation12 [shape = 'u8[32768]{0}', space=vmem, size = 0x8000, scoped, tag = 'output window, operand 0']
    %11 = vsyncpa [#allocation4], 0
    %s12 = scalar_lea.sflag [#allocation4], 1
    %13 = vsyncpa %s12, 0
    %14 = vsyncpa [#allocation7], 0
    %15 = vsyncpa [#allocation10], 0
    %16 = vsyncpa [#allocation5], 0
    %s17 = scalar_lea.sflag [#allocation5], 1
    %18 = vsyncpa %s17, 0
    loop: start=0, step=1, limit=4
    $region2: #{tpu_custom_call.1} parent=1 // loop_pre_header
      _
    $region3: #{tpu_custom_call.1} parent=1 // loop_header
      %s20 = sphi 0, %s24
      %p21 = scmp.ge.s32.totalorder %s20, 4
      %s27 = sphi 0, %s39
      %s28 = sphi 0, %s35
      %s29 = sphi 0, %s27
      %s30 = sphi 0, %s28
      %s31 = sphi 0, %s29
      %s32 = sphi 0, %s30
      %s44 = sphi 0, %s46
      %s47 = sphi 0, %s44
      %s48 = sphi 0, %s47
      %s64 = sphi 0, %s48
      %s70 = sphi 0, %s72
      %s73 = sphi 0, %s70
      %s74 = sphi 0, %s73
      %s90 = sphi 0, %s74
      %s94 = sphi 0, %s94
      %s96 = sphi 0, %s94
      %s97 = sphi 0, %s96
      %s111 = sphi 0, %s97
      %s115 = sphi 0, %s115
      %s117 = sphi 0, %s115
      %s118 = sphi 0, %s117
      %s132 = sphi 0, %s118
      %s136 = sphi 0, %s136
      %s138 = sphi 0, %s136
      %s139 = sphi 0, %s138
      %s153 = sphi 0, %s139
      %s157 = sphi 0, %s157
      %s159 = sphi 0, %s157
      %s160 = sphi 0, %s159
      %s174 = sphi 0, %s160
      %s180 = sphi 0, %s182
      %s183 = sphi 0, %s180
      %s184 = sphi 0, %s183
      %s200 = sphi 0, %s184
    $region4: #{tpu_custom_call.1} parent=1 // loop_header_branch
      %23 = sbr.rel (%p21) target = $region8
    $region5: #{tpu_custom_call.1} parent=1 // loop_body
      %s25 = ssub.s32 %s20, 1
      %s26 = ssub.s32 %s20, 2
      %s33 = sadd.s32 1, %s28
      %p34 = scmp.ge.s32.totalorder %s33, 1
      %s35 = scalar_select %p34, 0, %s33
      %s36 = sadd.s32 1, %s27
      %s37 = scalar_select %p34, %s36, %s27
      %p38 = scmp.ge.s32.totalorder %s37, 2
      %s39 = scalar_select %p38, 0, %s37
      %s40 = ssub.s32 %s27, %s39
      %s41 = ssub.s32 %s28, %s35
      %s42 = sor.u32 %s40, %s41
      %p43 = scmp.eq.s32.totalorder %s42, 0
      %s45 = sadd.s32 %s44, 1
      %s46 = scalar_select %p43, %s44, %s45
      %p49 = pneg %p43
      %p50 = scmp.eq.s32.totalorder %s20, 1
      %p51 = por %p49, %p50
      %p52 = scmp.ne.s32.totalorder %s44, %s47
      %p53 = scmp.eq.s32.totalorder %s20, 0
      %p54 = por %p52, %p53
      %p55 = scmp.ne.s32.totalorder %s44, %s47
      %p56 = scmp.eq.s32.totalorder %s25, 1
      %p57 = por %p55, %p56
      %p58 = scmp.ne.s32.totalorder %s47, %s48
      %p59 = scmp.eq.s32.totalorder %s25, 0
      %p60 = por %p58, %p59
      %p61 = scmp.ne.s32.totalorder %s47, %s48
      %p62 = scmp.eq.s32.totalorder %s26, 1
      %p63 = por %p61, %p62
      %p65 = scmp.ne.s32.totalorder %s48, %s64
      %p66 = scmp.eq.s32.totalorder %s26, 0
      %p67 = por %p65, %p66
      %s68 = ssub.s32 %s28, %s35
      %p69 = scmp.eq.s32.totalorder %s68, 0
      %s71 = sadd.s32 %s70, 1
      %s72 = scalar_select %p69, %s70, %s71
      %p75 = pneg %p69
      %p76 = scmp.eq.s32.totalorder %s20, 1
      %p77 = por %p75, %p76
      %p78 = scmp.ne.s32.totalorder %s70, %s73
      %p79 = scmp.eq.s32.totalorder %s20, 0
      %p80 = por %p78, %p79
      %p81 = scmp.ne.s32.totalorder %s70, %s73
      %p82 = scmp.eq.s32.totalorder %s25, 1
      %p83 = por %p81, %p82
      %p84 = scmp.ne.s32.totalorder %s73, %s74
      %p85 = scmp.eq.s32.totalorder %s25, 0
      %p86 = por %p84, %p85
      %p87 = scmp.ne.s32.totalorder %s73, %s74
      %p88 = scmp.eq.s32.totalorder %s26, 1
      %p89 = por %p87, %p88
      %p91 = scmp.ne.s32.totalorder %s74, %s90
      %p92 = scmp.eq.s32.totalorder %s26, 0
      %p93 = por %p91, %p92
      %s95 = sadd.s32 %s94, 1
      %p98 = scmp.eq.s32.totalorder %s20, 1
      %p99 = scmp.ne.s32.totalorder %s94, %s96
      %p100 = scmp.eq.s32.totalorder %s20, 0
      %p101 = por %p99, %p100
      %p102 = scmp.ne.s32.totalorder %s94, %s96
      %p103 = scmp.eq.s32.totalorder %s25, 1
      %p104 = por %p102, %p103
      %p105 = scmp.ne.s32.totalorder %s96, %s97
      %p106 = scmp.eq.s32.totalorder %s25, 0
      %p107 = por %p105, %p106
      %p108 = scmp.ne.s32.totalorder %s96, %s97
      %p109 = scmp.eq.s32.totalorder %s26, 1
      %p110 = por %p108, %p109
      %p112 = scmp.ne.s32.totalorder %s97, %s111
      %p113 = scmp.eq.s32.totalorder %s26, 0
      %p114 = por %p112, %p113
      %s116 = sadd.s32 %s115, 1
      %p119 = scmp.eq.s32.totalorder %s20, 1
      %p120 = scmp.ne.s32.totalorder %s115, %s117
      %p121 = scmp.eq.s32.totalorder %s20, 0
      %p122 = por %p120, %p121
      %p123 = scmp.ne.s32.totalorder %s115, %s117
      %p124 = scmp.eq.s32.totalorder %s25, 1
      %p125 = por %p123, %p124
      %p126 = scmp.ne.s32.totalorder %s117, %s118
      %p127 = scmp.eq.s32.totalorder %s25, 0
      %p128 = por %p126, %p127
      %p129 = scmp.ne.s32.totalorder %s117, %s118
      %p130 = scmp.eq.s32.totalorder %s26, 1
      %p131 = por %p129, %p130
      %p133 = scmp.ne.s32.totalorder %s118, %s132
      %p134 = scmp.eq.s32.totalorder %s26, 0
      %p135 = por %p133, %p134
      %s137 = sadd.s32 %s136, 1
      %p140 = scmp.eq.s32.totalorder %s20, 1
      %p141 = scmp.ne.s32.totalorder %s136, %s138
      %p142 = scmp.eq.s32.totalorder %s20, 0
      %p143 = por %p141, %p142
      %p144 = scmp.ne.s32.totalorder %s136, %s138
      %p145 = scmp.eq.s32.totalorder %s25, 1
      %p146 = por %p144, %p145
      %p147 = scmp.ne.s32.totalorder %s138, %s139
      %p148 = scmp.eq.s32.totalorder %s25, 0
      %p149 = por %p147, %p148
      %p150 = scmp.ne.s32.totalorder %s138, %s139
      %p151 = scmp.eq.s32.totalorder %s26, 1
      %p152 = por %p150, %p151
      %p154 = scmp.ne.s32.totalorder %s139, %s153
      %p155 = scmp.eq.s32.totalorder %s26, 0
      %p156 = por %p154, %p155
      %s158 = sadd.s32 %s157, 1
      %p161 = scmp.eq.s32.totalorder %s20, 1
      %p162 = scmp.ne.s32.totalorder %s157, %s159
      %p163 = scmp.eq.s32.totalorder %s20, 0
      %p164 = por %p162, %p163
      %p165 = scmp.ne.s32.totalorder %s157, %s159
      %p166 = scmp.eq.s32.totalorder %s25, 1
      %p167 = por %p165, %p166
      %p168 = scmp.ne.s32.totalorder %s159, %s160
      %p169 = scmp.eq.s32.totalorder %s25, 0
      %p170 = por %p168, %p169
      %p171 = scmp.ne.s32.totalorder %s159, %s160
      %p172 = scmp.eq.s32.totalorder %s26, 1
      %p173 = por %p171, %p172
      %p175 = scmp.ne.s32.totalorder %s160, %s174
      %p176 = scmp.eq.s32.totalorder %s26, 0
      %p177 = por %p175, %p176
      %s178 = ssub.s32 %s27, %s39
      %p179 = scmp.eq.s32.totalorder %s178, 0
      %s181 = sadd.s32 %s180, 1
      %s182 = scalar_select %p179, %s180, %s181
      %p185 = pneg %p179
      %p186 = scmp.eq.s32.totalorder %s20, 1
      %p187 = por %p185, %p186
      %p188 = scmp.ne.s32.totalorder %s180, %s183
      %p189 = scmp.eq.s32.totalorder %s20, 0
      %p190 = por %p188, %p189
      %p191 = scmp.ne.s32.totalorder %s180, %s183
      %p192 = scmp.eq.s32.totalorder %s25, 1
      %p193 = por %p191, %p192
      %p194 = scmp.ne.s32.totalorder %s183, %s184
      %p195 = scmp.eq.s32.totalorder %s25, 0
      %p196 = por %p194, %p195
      %p197 = scmp.ne.s32.totalorder %s183, %s184
      %p198 = scmp.eq.s32.totalorder %s26, 1
      %p199 = por %p197, %p198
      %p201 = scmp.ne.s32.totalorder %s184, %s200
      %p202 = scmp.eq.s32.totalorder %s26, 0
      %p203 = por %p201, %p202
      %p204 = scmp.le.s32.totalorder 1, %s20
      %p205 = scmp.lt.s32.totalorder %s20, 3
      %p206 = pnand %p204, %p205
      %p207 = pneg %p206
      // Predicated region
      $region9: #{tpu_custom_call.1} parent=5 // pred_check
        _
      $region10: #{tpu_custom_call.1} parent=5 // pred_check_branch
        %209 = sbr.rel (%p206) target = $region12
      $region11: #{tpu_custom_call.1} parent=5 // pred_region
        %s210 = ssub.s32 %s20, 1
        // Predicated region
        $region13: #{tpu_custom_call.1} parent=11 // pred_check
          %p211 = pneg %p86
        $region14: #{tpu_custom_call.1} parent=11 // pred_check_branch
          %213 = sbr.rel (%p211) target = $region16
        $region15: #{tpu_custom_call.1} parent=11 // pred_region
          %s214 = smul.u32 16, %s30
          %s216 = ssub.s32 1024, 1024
          %217 = vsyncadd [#allocation7], %s216
          %s218 = smul.addr %s214, 64
          %s219 = scalar_lea.hbm %s1, %s218
          %s220 = sshll.u32 [#allocation6], 4
          %s221 = int_to_ptr.vmem [resolvable:$true] %s220
          %226 = dma.hbm_to_vmem [thread:$0]  %s219, 1024, %s221, [#allocation7], 64, 64, 4
        $region16: #{tpu_custom_call.1} parent=11 // pred_fallthru
          _
        // Predicated region
        $region17: #{tpu_custom_call.1} parent=11 // pred_check
          %p227 = pneg %p107
        $region18: #{tpu_custom_call.1} parent=11 // pred_check_branch
          %229 = sbr.rel (%p227) target = $region20
        $region19: #{tpu_custom_call.1} parent=11 // pred_region
          %s231 = ssub.s32 1024, 1024
          %232 = vsyncadd [#allocation7], %s231
          %s233 = sshll.u32 [#allocation8], 4
          %s234 = int_to_ptr.vmem [resolvable:$true] %s233
          %239 = dma.hbm_to_vmem [thread:$0]  %s2, 1024, %s234, [#allocation7], 64, 64, 4
        $region20: #{tpu_custom_call.1} parent=11 // pred_fallthru
          _
        // Predicated region
        $region21: #{tpu_custom_call.1} parent=11 // pred_check
          %p240 = pneg %p128
        $region22: #{tpu_custom_call.1} parent=11 // pred_check_branch
          %242 = sbr.rel (%p240) target = $region24
        $region23: #{tpu_custom_call.1} parent=11 // pred_region
          %s244 = ssub.s32 128, 128
          %245 = vsyncadd [#allocation10], %s244
          %s247 = sshll.u32 [#allocation9], 4
          %s248 = int_to_ptr.vmem [resolvable:$true] %s247
          %250 = dma.hbm_to_vmem [thread:$0]  %s3, 128, %s248, [#allocation10]
        $region24: #{tpu_custom_call.1} parent=11 // pred_fallthru
          _
        // Predicated region
        $region25: #{tpu_custom_call.1} parent=11 // pred_check
          %p251 = pneg %p149
        $region26: #{tpu_custom_call.1} parent=11 // pred_check_branch
          %253 = sbr.rel (%p251) target = $region28
        $region27: #{tpu_custom_call.1} parent=11 // pred_region
          %s255 = ssub.s32 1024, 1024
          %256 = vsyncadd [#allocation10], %s255
          %s257 = sshll.u32 [#allocation11], 4
          %s258 = int_to_ptr.vmem [resolvable:$true] %s257
          %263 = dma.hbm_to_vmem [thread:$0]  %s4, 1024, %s258, [#allocation10], 64, 64, 4
        $region28: #{tpu_custom_call.1} parent=11 // pred_fallthru
          _
        // Predicated region
        $region29: #{tpu_custom_call.1} parent=11 // pred_check
          %p264 = pneg %p170
        $region30: #{tpu_custom_call.1} parent=11 // pred_check_branch
          %266 = sbr.rel (%p264) target = $region32
        $region31: #{tpu_custom_call.1} parent=11 // pred_region
          _
        $region32: #{tpu_custom_call.1} parent=11 // pred_fallthru
          _
      $region12: #{tpu_custom_call.1} parent=5 // pred_fallthru
        _
      %p267 = scmp.lt.s32.totalorder %s20, 2
      // Predicated region
      $region33: #{tpu_custom_call.1} parent=5 // pred_check
        %p268 = pneg %p267
      $region34: #{tpu_custom_call.1} parent=5 // pred_check_branch
        %270 = sbr.rel (%p268) target = $region36
      $region35: #{tpu_custom_call.1} parent=5 // pred_region
        // Predicated region
        $region37: #{tpu_custom_call.1} parent=35 // pred_check
          %p271 = pneg %p54
        $region38: #{tpu_custom_call.1} parent=35 // pred_check_branch
          %273 = sbr.rel (%p271) target = $region40
        $region39: #{tpu_custom_call.1} parent=35 // pred_region
          %s274 = sand.u32 %s44, 1
          %s275 = scalar_lea.sflag [#allocation4], %s274
          %s276 = sand.u32 %s44, 1
          %s277 = smul.addr %s276, 32
          %s278 = scalar_lea.vmem [#allocation3], %s277
          %s279 = smul.u32 8, %s27
          %s281 = ssub.s32 512, 512
          %282 = vsyncadd %s275, %s281
          %s283 = sadd.s32 %s28, %s279
          %s284 = smul.addr %s283, 64
          %s285 = scalar_lea.hbm %s0, %s284
          %s286 = sshll.u32 %s278, 4
          %s287 = int_to_ptr.vmem [resolvable:$true] %s286
          %292 = dma.hbm_to_vmem [thread:$0]  %s285, 512, %s287, %s275, 64, 64, 4
        $region40: #{tpu_custom_call.1} parent=35 // pred_fallthru
          _
      $region36: #{tpu_custom_call.1} parent=5 // pred_fallthru
        _
      %p293 = scmp.le.s32.totalorder 1, %s20
      %p294 = scmp.lt.s32.totalorder %s20, 3
      %p295 = pnand %p293, %p294
      %p296 = pneg %p295
      // Predicated region
      $region41: #{tpu_custom_call.1} parent=5 // pred_check
        _
      $region42: #{tpu_custom_call.1} parent=5 // pred_check_branch
        %298 = sbr.rel (%p295) target = $region44
      $region43: #{tpu_custom_call.1} parent=5 // pred_region
        %s299 = ssub.s32 %s20, 1
        %s300 = sand.u32 %s47, 1
        %s301 = scalar_lea.sflag [#allocation4], %s300
        %s302 = sand.u32 %s47, 1
        %s303 = smul.addr %s302, 32
        %s304 = scalar_lea.vmem [#allocation3], %s303
        // Predicated region
        $region45: #{tpu_custom_call.1} parent=43 // pred_check
          %p305 = pneg %p60
        $region46: #{tpu_custom_call.1} parent=43 // pred_check_branch
          %307 = sbr.rel (%p305) target = $region48
        $region47: #{tpu_custom_call.1} parent=43 // pred_region
          %308 = dma.done %s301, 512
        $region48: #{tpu_custom_call.1} parent=43 // pred_fallthru
          _
        // Predicated region
        $region49: #{tpu_custom_call.1} parent=43 // pred_check
          %p309 = pneg %p86
        $region50: #{tpu_custom_call.1} parent=43 // pred_check_branch
          %311 = sbr.rel (%p309) target = $region52
        $region51: #{tpu_custom_call.1} parent=43 // pred_region
          %312 = dma.done [#allocation7], 1024
        $region52: #{tpu_custom_call.1} parent=43 // pred_fallthru
          _
        // Predicated region
        $region53: #{tpu_custom_call.1} parent=43 // pred_check
          %p313 = pneg %p107
        $region54: #{tpu_custom_call.1} parent=43 // pred_check_branch
          %315 = sbr.rel (%p313) target = $region56
        $region55: #{tpu_custom_call.1} parent=43 // pred_region
          %316 = dma.done [#allocation7], 1024
        $region56: #{tpu_custom_call.1} parent=43 // pred_fallthru
          _
        // Predicated region
        $region57: #{tpu_custom_call.1} parent=43 // pred_check
          %p317 = pneg %p128
        $region58: #{tpu_custom_call.1} parent=43 // pred_check_branch
          %319 = sbr.rel (%p317) target = $region60
        $region59: #{tpu_custom_call.1} parent=43 // pred_region
          %320 = dma.done [#allocation10], 128
        $region60: #{tpu_custom_call.1} parent=43 // pred_fallthru
          _
        // Predicated region
        $region61: #{tpu_custom_call.1} parent=43 // pred_check
          %p321 = pneg %p149
        $region62: #{tpu_custom_call.1} parent=43 // pred_check_branch
          %323 = sbr.rel (%p321) target = $region64
        $region63: #{tpu_custom_call.1} parent=43 // pred_region
          %324 = dma.done [#allocation10], 1024
        $region64: #{tpu_custom_call.1} parent=43 // pred_fallthru
          _
        %s325 = sand.u32 %s47, 1
        %s326 = scalar_lea.sflag [#allocation4], %s325
        %s327 = sand.u32 %s47, 1
        %s328 = smul.addr %s327, 32
        %s329 = scalar_lea.vmem [#allocation3], %s328
        %p330 = pneg %p60
        %p331 = pneg %p57
        %p332 = pneg %p86
        %p333 = pneg %p83
        %p334 = pneg %p107
        %p335 = pneg %p104
        %p336 = pneg %p128
        %p337 = pneg %p125
        %p338 = pneg %p149
        %p339 = pneg %p146
        %p340 = pneg %p170
        %p341 = pneg %p167
        %p342 = pneg %p196
        %p343 = pneg %p193
        %s344 = sand.u32 %s183, 1
        %s345 = scalar_lea.sflag [#allocation5], %s344
        %s346 = sand.u32 %s183, 1
        %s347 = smul.addr %s346, 32
        %s348 = scalar_lea.vmem [#allocation12], %s347
        %s349 = smul.u32 8, %s29
        %s350 = smul.u32 16, %s30
        %s351 = smul.u32 8, %s29
        %p353 = scmp.eq.s32.totalorder %s30, 0
        // Predicated region
        $region65: #{tpu_custom_call.1} parent=43 // pred_check
          %p354 = pneg %p353
        $region66: #{tpu_custom_call.1} parent=43 // pred_check_branch
          %356 = sbr.rel (%p354) target = $region68
        $region67: #{tpu_custom_call.1} parent=43 // pred_region
          %357 = vst [vmem:[#allocation2] sm:$0xff] 0.0
          %358 = vst [vmem:[#allocation2 + $0x8] sm:$0xff] 0.0
          %359 = vst [vmem:[#allocation2 + $0x10] sm:$0xff] 0.0
          %360 = vst [vmem:[#allocation2 + $0x18] sm:$0xff] 0.0
          %361 = vst [vmem:[#allocation2 + $0x20] sm:$0xff] 0.0
          %362 = vst [vmem:[#allocation2 + $0x28] sm:$0xff] 0.0
          %363 = vst [vmem:[#allocation2 + $0x30] sm:$0xff] 0.0
          %364 = vst [vmem:[#allocation2 + $0x38] sm:$0xff] 0.0
        $region68: #{tpu_custom_call.1} parent=43 // pred_fallthru
          _
        %v365 = vld [vmem:[#allocation2] sm:$0xff]
        %v366 = vld [vmem:[#allocation2 + $0x8] sm:$0xff]
        %v367 = vld [vmem:[#allocation2 + $0x10] sm:$0xff]
        %v368 = vld [vmem:[#allocation2 + $0x18] sm:$0xff]
        %v369 = vld [vmem:[#allocation2 + $0x20] sm:$0xff]
        %v370 = vld [vmem:[#allocation2 + $0x28] sm:$0xff]
        %v371 = vld [vmem:[#allocation2 + $0x30] sm:$0xff]
        %v372 = vld [vmem:[#allocation2 + $0x38] sm:$0xff]
        %v373 = vld [vmem:[%s304] sm:$0xf]
        %v374 = vld [vmem:[%s304 + $0x4] sm:$0xf]
        %v375 = vld [vmem:[%s304 + $0x8] sm:$0xf]
        %v376 = vld [vmem:[%s304 + $0xc] sm:$0xf]
        %v377 = vld [vmem:[%s304 + $0x10] sm:$0xf]
        %v378 = vld [vmem:[%s304 + $0x14] sm:$0xf]
        %v379 = vld [vmem:[%s304 + $0x18] sm:$0xf]
        %v380 = vld [vmem:[%s304 + $0x1c] sm:$0xf]
        %v381 = vld [vmem:[#allocation6] sm:$0xf]
        %v382 = vld [vmem:[#allocation6 + $0x4] sm:$0xf]
        %v383 = vld [vmem:[#allocation6 + $0x8] sm:$0xf]
        %v384 = vld [vmem:[#allocation6 + $0xc] sm:$0xf]
        %v385 = vld [vmem:[#allocation6 + $0x10] sm:$0xf]
        %v386 = vld [vmem:[#allocation6 + $0x14] sm:$0xf]
        %v387 = vld [vmem:[#allocation6 + $0x18] sm:$0xf]
        %v388 = vld [vmem:[#allocation6 + $0x1c] sm:$0xf]
        %v389 = vld [vmem:[#allocation6 + $0x20] sm:$0xf]
        %v390 = vld [vmem:[#allocation6 + $0x24] sm:$0xf]
        %v391 = vld [vmem:[#allocation6 + $0x28] sm:$0xf]
        %v392 = vld [vmem:[#allocation6 + $0x2c] sm:$0xf]
        %v393 = vld [vmem:[#allocation6 + $0x30] sm:$0xf]
        %v394 = vld [vmem:[#allocation6 + $0x34] sm:$0xf]
        %v395 = vld [vmem:[#allocation6 + $0x38] sm:$0xf]
        %v396 = vld [vmem:[#allocation6 + $0x3c] sm:$0xf]
        %v405 = vunpack.c.l.b16 %v373
        %v406 = vunpack.c.l.b16 %v374
        %v407 = vunpack.c.l.b16 %v375
        %v408 = vunpack.c.l.b16 %v376
        %v409 = vunpack.c.l.b16 %v377
        %v410 = vunpack.c.l.b16 %v378
        %v411 = vunpack.c.l.b16 %v379
        %v412 = vunpack.c.l.b16 %v380
        %v413 = vpack.c.b16 %v406, %v405
        %v414 = vpack.c.b16 %v408, %v407
        %v415 = vpack.c.b16 %v410, %v409
        %v416 = vpack.c.b16 %v412, %v411
        %v437 = vunpack.c.l.b16 %v381
        %v438 = vunpack.c.l.b16 %v382
        %v439 = vunpack.c.l.b16 %v383
        %v440 = vunpack.c.l.b16 %v384
        %v441 = vunpack.c.l.b16 %v385
        %v442 = vunpack.c.l.b16 %v386
        %v443 = vunpack.c.l.b16 %v387
        %v444 = vunpack.c.l.b16 %v388
        %v445 = vunpack.c.l.b16 %v389
        %v446 = vunpack.c.l.b16 %v390
        %v447 = vunpack.c.l.b16 %v391
        %v448 = vunpack.c.l.b16 %v392
        %v449 = vunpack.c.l.b16 %v393
        %v450 = vunpack.c.l.b16 %v394
        %v451 = vunpack.c.l.b16 %v395
        %v452 = vunpack.c.l.b16 %v396
        %v453 = vpack.c.b16 %v438, %v437
        %v454 = vpack.c.b16 %v440, %v439
        %v455 = vpack.c.b16 %v442, %v441
        %v456 = vpack.c.b16 %v444, %v443
        %v457 = vpack.c.b16 %v446, %v445
        %v458 = vpack.c.b16 %v448, %v447
        %v459 = vpack.c.b16 %v450, %v449
        %v460 = vpack.c.b16 %v452, %v451
        %469 = vmatprep.subr.bf16.mxu0 0
        %470 = vmatpush1.bf16.msra.mxu0 %v460
        %471 = vmatprep.subr.bf16.mxu0 0
        %472 = vmatpush1.bf16.msra.mxu0 %v459
        %473 = vmatprep.subr.bf16.mxu0 0
        %474 = vmatpush1.bf16.msra.mxu0 %v458
        %475 = vmatprep.subr.bf16.mxu0 0
        %476 = vmatpush1.bf16.msra.mxu0 %v457
        %477 = vmatprep.subr.bf16.mxu0 0
        %478 = vmatpush1.bf16.msra.mxu0 %v456
        %479 = vmatprep.subr.bf16.mxu0 0
        %480 = vmatpush1.bf16.msra.mxu0 %v455
        %481 = vmatprep.subr.bf16.mxu0 0
        %482 = vmatpush1.bf16.msra.mxu0 %v454
        %483 = vmatprep.subr.bf16.mxu0 0
        %484 = vmatpush1.bf16.msra.mxu0 %v453
        %485 = vmatprep.subr.bf16.mxu0 0
        %486 = vmatpush2.bf16.msra.mxu0 0
        %487 = vmatprep.subr.bf16.mxu0 0
        %488 = vmatpush2.bf16.msra.mxu0 0
        %489 = vmatprep.subr.bf16.mxu0 0
        %490 = vmatpush2.bf16.msra.mxu0 0
        %491 = vmatprep.subr.bf16.mxu0 0
        %492 = vmatpush2.bf16.msra.mxu0 0
        %493 = vmatprep.subr.bf16.mxu0 0
        %494 = vmatpush2.bf16.msra.mxu0 0
        %495 = vmatprep.subr.bf16.mxu0 0
        %496 = vmatpush2.bf16.msra.mxu0 0
        %497 = vmatprep.subr.bf16.mxu0 0
        %498 = vmatpush2.bf16.msra.mxu0 0
        %499 = vmatprep.subr.bf16.mxu0 0
        %500 = vmatpush2.bf16.msra.mxu0 0
        %501 = vmatprep.mubr.bf16.mxu0 0
        %502 = vmatmul.mubr.bf16.gmra.mxu0 %v413
        %v503 = vpop.f32.mrf.mxu0
        %v504 = vadd.f32 0.0, %v503
        %v505 = vpop.f32.mrf.mxu0
        %v506 = vpop.f32.mrf.mxu0
        %v507 = vadd.f32 0.0, %v506
        %v508 = vpop.f32.mrf.mxu0
        %509 = vmatprep.mubr.bf16.mxu0 0
        %510 = vmatmul.mubr.bf16.gmra.mxu0 %v414
        %v511 = vpop.f32.mrf.mxu0
        %v512 = vadd.f32 0.0, %v511
        %v513 = vpop.f32.mrf.mxu0
        %v514 = vpop.f32.mrf.mxu0
        %v515 = vadd.f32 0.0, %v514
        %v516 = vpop.f32.mrf.mxu0
        %517 = vmatprep.mubr.bf16.mxu0 0
        %518 = vmatmul.mubr.bf16.gmra.mxu0 %v415
        %v519 = vpop.f32.mrf.mxu0
        %v520 = vadd.f32 0.0, %v519
        %v521 = vpop.f32.mrf.mxu0
        %v522 = vpop.f32.mrf.mxu0
        %v523 = vadd.f32 0.0, %v522
        %v524 = vpop.f32.mrf.mxu0
        %525 = vmatprep.mubr.bf16.mxu0 0
        %526 = vmatmul.mubr.bf16.gmra.mxu0 %v416
        %v527 = vpop.f32.mrf.mxu0
        %v528 = vadd.f32 0.0, %v527
        %v529 = vpop.f32.mrf.mxu0
        %v530 = vpop.f32.mrf.mxu0
        %v531 = vadd.f32 0.0, %v530
        %v532 = vpop.f32.mrf.mxu0
        %533 = vdwg.mxu0
        %v534 = vadd.f32 %v365, %v504
        %v535 = vadd.f32 %v366, %v507
        %v536 = vadd.f32 %v367, %v512
        %v537 = vadd.f32 %v368, %v515
        %v538 = vadd.f32 %v369, %v520
        %v539 = vadd.f32 %v370, %v523
        %v540 = vadd.f32 %v371, %v528
        %v541 = vadd.f32 %v372, %v531
        %542 = vst [vmem:[#allocation2] sm:$0xff] %v534
        %543 = vst [vmem:[#allocation2 + $0x8] sm:$0xff] %v535
        %544 = vst [vmem:[#allocation2 + $0x10] sm:$0xff] %v536
        %545 = vst [vmem:[#allocation2 + $0x18] sm:$0xff] %v537
        %546 = vst [vmem:[#allocation2 + $0x20] sm:$0xff] %v538
        %547 = vst [vmem:[#allocation2 + $0x28] sm:$0xff] %v539
        %548 = vst [vmem:[#allocation2 + $0x30] sm:$0xff] %v540
        %549 = vst [vmem:[#allocation2 + $0x38] sm:$0xff] %v541
        // Predicated region
        $region69: #{tpu_custom_call.1} parent=43 // pred_check
          %p550 = pneg %p353
        $region70: #{tpu_custom_call.1} parent=43 // pred_check_branch
          %552 = sbr.rel (%p550) target = $region72
        $region71: #{tpu_custom_call.1} parent=43 // pred_region
          %v553 = vld [vmem:[#allocation2] sm:$0xff]
          %v554 = vld [vmem:[#allocation2 + $0x8] sm:$0xff]
          %v555 = vld [vmem:[#allocation2 + $0x10] sm:$0xff]
          %v556 = vld [vmem:[#allocation2 + $0x18] sm:$0xff]
          %v557 = vld [vmem:[#allocation2 + $0x20] sm:$0xff]
          %v558 = vld [vmem:[#allocation2 + $0x28] sm:$0xff]
          %v559 = vld [vmem:[#allocation2 + $0x30] sm:$0xff]
          %v560 = vld [vmem:[#allocation2 + $0x38] sm:$0xff]
          %v561 = vpack.c.bf16 %v554, %v553
          %v562 = vpack.c.bf16 %v556, %v555
          %v563 = vpack.c.bf16 %v558, %v557
          %v564 = vpack.c.bf16 %v560, %v559
          %v565 = vld [vmem:[#allocation8] sm:$0xf]
          %v566 = vld [vmem:[#allocation8 + $0x4] sm:$0xf]
          %v567 = vld [vmem:[#allocation8 + $0x8] sm:$0xf]
          %v568 = vld [vmem:[#allocation8 + $0xc] sm:$0xf]
          %v569 = vld [vmem:[#allocation8 + $0x10] sm:$0xf]
          %v570 = vld [vmem:[#allocation8 + $0x14] sm:$0xf]
          %v571 = vld [vmem:[#allocation8 + $0x18] sm:$0xf]
          %v572 = vld [vmem:[#allocation8 + $0x1c] sm:$0xf]
          %v573 = vld [vmem:[#allocation8 + $0x20] sm:$0xf]
          %v574 = vld [vmem:[#allocation8 + $0x24] sm:$0xf]
          %v575 = vld [vmem:[#allocation8 + $0x28] sm:$0xf]
          %v576 = vld [vmem:[#allocation8 + $0x2c] sm:$0xf]
          %v577 = vld [vmem:[#allocation8 + $0x30] sm:$0xf]
          %v578 = vld [vmem:[#allocation8 + $0x34] sm:$0xf]
          %v579 = vld [vmem:[#allocation8 + $0x38] sm:$0xf]
          %v580 = vld [vmem:[#allocation8 + $0x3c] sm:$0xf]
          %v581 = vld [vmem:[#allocation9] sm:$0x1]
          %v582 = vlaneseq
          %v583 = vshrl.u32 %v582, 7
          %v584 = vsub.s32 0, %v583
          %v585 = vrot.slane %v581, %v584
          %v602 = vunpack.c.l.b16 %v565
          %v603 = vunpack.c.l.b16 %v566
          %v604 = vunpack.c.l.b16 %v567
          %v605 = vunpack.c.l.b16 %v568
          %v606 = vunpack.c.l.b16 %v569
          %v607 = vunpack.c.l.b16 %v570
          %v608 = vunpack.c.l.b16 %v571
          %v609 = vunpack.c.l.b16 %v572
          %v610 = vunpack.c.l.b16 %v573
          %v611 = vunpack.c.l.b16 %v574
          %v612 = vunpack.c.l.b16 %v575
          %v613 = vunpack.c.l.b16 %v576
          %v614 = vunpack.c.l.b16 %v577
          %v615 = vunpack.c.l.b16 %v578
          %v616 = vunpack.c.l.b16 %v579
          %v617 = vunpack.c.l.b16 %v580
          %v618 = vpack.c.b16 %v603, %v602
          %v619 = vpack.c.b16 %v605, %v604
          %v620 = vpack.c.b16 %v607, %v606
          %v621 = vpack.c.b16 %v609, %v608
          %v622 = vpack.c.b16 %v611, %v610
          %v623 = vpack.c.b16 %v613, %v612
          %v624 = vpack.c.b16 %v615, %v614
          %v625 = vpack.c.b16 %v617, %v616
          %634 = vmatprep.subr.bf16.mxu0 0
          %635 = vmatpush1.bf16.msra.mxu0 %v625
          %636 = vmatprep.subr.bf16.mxu0 0
          %637 = vmatpush1.bf16.msra.mxu0 %v624
          %638 = vmatprep.subr.bf16.mxu0 0
          %639 = vmatpush1.bf16.msra.mxu0 %v623
          %640 = vmatprep.subr.bf16.mxu0 0
          %641 = vmatpush1.bf16.msra.mxu0 %v622
          %642 = vmatprep.subr.bf16.mxu0 0
          %643 = vmatpush1.bf16.msra.mxu0 %v621
          %644 = vmatprep.subr.bf16.mxu0 0
          %645 = vmatpush1.bf16.msra.mxu0 %v620
          %646 = vmatprep.subr.bf16.mxu0 0
          %647 = vmatpush1.bf16.msra.mxu0 %v619
          %648 = vmatprep.subr.bf16.mxu0 0
          %649 = vmatpush1.bf16.msra.mxu0 %v618
          %650 = vmatprep.subr.bf16.mxu0 0
          %651 = vmatpush2.bf16.msra.mxu0 0
          %652 = vmatprep.subr.bf16.mxu0 0
          %653 = vmatpush2.bf16.msra.mxu0 0
          %654 = vmatprep.subr.bf16.mxu0 0
          %655 = vmatpush2.bf16.msra.mxu0 0
          %656 = vmatprep.subr.bf16.mxu0 0
          %657 = vmatpush2.bf16.msra.mxu0 0
          %658 = vmatprep.subr.bf16.mxu0 0
          %659 = vmatpush2.bf16.msra.mxu0 0
          %660 = vmatprep.subr.bf16.mxu0 0
          %661 = vmatpush2.bf16.msra.mxu0 0
          %662 = vmatprep.subr.bf16.mxu0 0
          %663 = vmatpush2.bf16.msra.mxu0 0
          %664 = vmatprep.subr.bf16.mxu0 0
          %665 = vmatpush2.bf16.msra.mxu0 0
          %666 = vmatprep.mubr.bf16.mxu0 0
          %667 = vmatmul.mubr.bf16.gmra.mxu0 %v561
          %v668 = vpop.f32.mrf.mxu0
          %v669 = vadd.f32 %v585, %v668
          %v670 = vpop.f32.mrf.mxu0
          %v671 = vpop.f32.mrf.mxu0
          %v672 = vadd.f32 %v585, %v671
          %v673 = vpop.f32.mrf.mxu0
          %674 = vmatprep.mubr.bf16.mxu0 0
          %675 = vmatmul.mubr.bf16.gmra.mxu0 %v562
          %v676 = vpop.f32.mrf.mxu0
          %v677 = vadd.f32 %v585, %v676
          %v678 = vpop.f32.mrf.mxu0
          %v679 = vpop.f32.mrf.mxu0
          %v680 = vadd.f32 %v585, %v679
          %v681 = vpop.f32.mrf.mxu0
          %682 = vmatprep.mubr.bf16.mxu0 0
          %683 = vmatmul.mubr.bf16.gmra.mxu0 %v563
          %v684 = vpop.f32.mrf.mxu0
          %v685 = vadd.f32 %v585, %v684
          %v686 = vpop.f32.mrf.mxu0
          %v687 = vpop.f32.mrf.mxu0
          %v688 = vadd.f32 %v585, %v687
          %v689 = vpop.f32.mrf.mxu0
          %690 = vmatprep.mubr.bf16.mxu0 0
          %691 = vmatmul.mubr.bf16.gmra.mxu0 %v564
          %v692 = vpop.f32.mrf.mxu0
          %v693 = vadd.f32 %v585, %v692
          %v694 = vpop.f32.mrf.mxu0
          %v695 = vpop.f32.mrf.mxu0
          %v696 = vadd.f32 %v585, %v695
          %v697 = vpop.f32.mrf.mxu0
          %698 = vdwg.mxu0
          %v699 = vmax.f32 %v669, 0.0
          %v700 = vmax.f32 %v672, 0.0
          %v701 = vmax.f32 %v677, 0.0
          %v702 = vmax.f32 %v680, 0.0
          %v703 = vmax.f32 %v685, 0.0
          %v704 = vmax.f32 %v688, 0.0
          %v705 = vmax.f32 %v693, 0.0
          %v706 = vmax.f32 %v696, 0.0
          %v707 = vld [vmem:[#allocation9 + $0x1] sm:$0x1]
          %v708 = vlaneseq
          %v709 = vshrl.u32 %v708, 7
          %v710 = vsub.s32 0, %v709
          %v711 = vrot.slane %v707, %v710
          %v712 = vmul.f32 %v699, %v711
          %v713 = vmul.f32 %v700, %v711
          %v714 = vmul.f32 %v701, %v711
          %v715 = vmul.f32 %v702, %v711
          %v716 = vmul.f32 %v703, %v711
          %v717 = vmul.f32 %v704, %v711
          %v718 = vmul.f32 %v705, %v711
          %v719 = vmul.f32 %v706, %v711
          %v720 = vld [vmem:[#allocation9 + $0x2] sm:$0x1]
          %v721 = vlaneseq
          %v722 = vshrl.u32 %v721, 7
          %v723 = vsub.s32 0, %v722
          %v724 = vrot.slane %v720, %v723
          %v725 = vadd.f32 %v712, %v724
          %v726 = vadd.f32 %v713, %v724
          %v727 = vadd.f32 %v714, %v724
          %v728 = vadd.f32 %v715, %v724
          %v729 = vadd.f32 %v716, %v724
          %v730 = vadd.f32 %v717, %v724
          %v731 = vadd.f32 %v718, %v724
          %v732 = vadd.f32 %v719, %v724
          %v733 = vpack.c.bf16 %v726, %v725
          %v734 = vpack.c.bf16 %v728, %v727
          %v735 = vpack.c.bf16 %v730, %v729
          %v736 = vpack.c.bf16 %v732, %v731
          %v737 = vld [vmem:[#allocation11] sm:$0xf]
          %v738 = vld [vmem:[#allocation11 + $0x4] sm:$0xf]
          %v739 = vld [vmem:[#allocation11 + $0x8] sm:$0xf]
          %v740 = vld [vmem:[#allocation11 + $0xc] sm:$0xf]
          %v741 = vld [vmem:[#allocation11 + $0x10] sm:$0xf]
          %v742 = vld [vmem:[#allocation11 + $0x14] sm:$0xf]
          %v743 = vld [vmem:[#allocation11 + $0x18] sm:$0xf]
          %v744 = vld [vmem:[#allocation11 + $0x1c] sm:$0xf]
          %v745 = vld [vmem:[#allocation11 + $0x20] sm:$0xf]
          %v746 = vld [vmem:[#allocation11 + $0x24] sm:$0xf]
          %v747 = vld [vmem:[#allocation11 + $0x28] sm:$0xf]
          %v748 = vld [vmem:[#allocation11 + $0x2c] sm:$0xf]
          %v749 = vld [vmem:[#allocation11 + $0x30] sm:$0xf]
          %v750 = vld [vmem:[#allocation11 + $0x34] sm:$0xf]
          %v751 = vld [vmem:[#allocation11 + $0x38] sm:$0xf]
          %v752 = vld [vmem:[#allocation11 + $0x3c] sm:$0xf]
          %v753 = vld [vmem:[%s5] sm:$0x1]
          %v754 = vlaneseq
          %v755 = vshrl.u32 %v754, 7
          %v756 = vsub.s32 0, %v755
          %v757 = vrot.slane %v753, %v756
          %v774 = vunpack.c.l.b16 %v737
          %v775 = vunpack.c.l.b16 %v738
          %v776 = vunpack.c.l.b16 %v739
          %v777 = vunpack.c.l.b16 %v740
          %v778 = vunpack.c.l.b16 %v741
          %v779 = vunpack.c.l.b16 %v742
          %v780 = vunpack.c.l.b16 %v743
          %v781 = vunpack.c.l.b16 %v744
          %v782 = vunpack.c.l.b16 %v745
          %v783 = vunpack.c.l.b16 %v746
          %v784 = vunpack.c.l.b16 %v747
          %v785 = vunpack.c.l.b16 %v748
          %v786 = vunpack.c.l.b16 %v749
          %v787 = vunpack.c.l.b16 %v750
          %v788 = vunpack.c.l.b16 %v751
          %v789 = vunpack.c.l.b16 %v752
          %v790 = vpack.c.b16 %v775, %v774
          %v791 = vpack.c.b16 %v777, %v776
          %v792 = vpack.c.b16 %v779, %v778
          %v793 = vpack.c.b16 %v781, %v780
          %v794 = vpack.c.b16 %v783, %v782
          %v795 = vpack.c.b16 %v785, %v784
          %v796 = vpack.c.b16 %v787, %v786
          %v797 = vpack.c.b16 %v789, %v788
          %806 = vmatprep.subr.bf16.mxu0 0
          %807 = vmatpush1.bf16.msra.mxu0 %v797
          %808 = vmatprep.subr.bf16.mxu0 0
          %809 = vmatpush1.bf16.msra.mxu0 %v796
          %810 = vmatprep.subr.bf16.mxu0 0
          %811 = vmatpush1.bf16.msra.mxu0 %v795
          %812 = vmatprep.subr.bf16.mxu0 0
          %813 = vmatpush1.bf16.msra.mxu0 %v794
          %814 = vmatprep.subr.bf16.mxu0 0
          %815 = vmatpush1.bf16.msra.mxu0 %v793
          %816 = vmatprep.subr.bf16.mxu0 0
          %817 = vmatpush1.bf16.msra.mxu0 %v792
          %818 = vmatprep.subr.bf16.mxu0 0
          %819 = vmatpush1.bf16.msra.mxu0 %v791
          %820 = vmatprep.subr.bf16.mxu0 0
          %821 = vmatpush1.bf16.msra.mxu0 %v790
          %822 = vmatprep.subr.bf16.mxu0 0
          %823 = vmatpush2.bf16.msra.mxu0 0
          %824 = vmatprep.subr.bf16.mxu0 0
          %825 = vmatpush2.bf16.msra.mxu0 0
          %826 = vmatprep.subr.bf16.mxu0 0
          %827 = vmatpush2.bf16.msra.mxu0 0
          %828 = vmatprep.subr.bf16.mxu0 0
          %829 = vmatpush2.bf16.msra.mxu0 0
          %830 = vmatprep.subr.bf16.mxu0 0
          %831 = vmatpush2.bf16.msra.mxu0 0
          %832 = vmatprep.subr.bf16.mxu0 0
          %833 = vmatpush2.bf16.msra.mxu0 0
          %834 = vmatprep.subr.bf16.mxu0 0
          %835 = vmatpush2.bf16.msra.mxu0 0
          %836 = vmatprep.subr.bf16.mxu0 0
          %837 = vmatpush2.bf16.msra.mxu0 0
          %838 = vmatprep.mubr.bf16.mxu0 0
          %839 = vmatmul.mubr.bf16.gmra.mxu0 %v733
          %v840 = vpop.f32.mrf.mxu0
          %v841 = vadd.f32 %v757, %v840
          %v842 = vpop.f32.mrf.mxu0
          %v843 = vpop.f32.mrf.mxu0
          %v844 = vadd.f32 %v757, %v843
          %v845 = vpop.f32.mrf.mxu0
          %846 = vmatprep.mubr.bf16.mxu0 0
          %847 = vmatmul.mubr.bf16.gmra.mxu0 %v734
          %v848 = vpop.f32.mrf.mxu0
          %v849 = vadd.f32 %v757, %v848
          %v850 = vpop.f32.mrf.mxu0
          %v851 = vpop.f32.mrf.mxu0
          %v852 = vadd.f32 %v757, %v851
          %v853 = vpop.f32.mrf.mxu0
          %854 = vmatprep.mubr.bf16.mxu0 0
          %855 = vmatmul.mubr.bf16.gmra.mxu0 %v735
          %v856 = vpop.f32.mrf.mxu0
          %v857 = vadd.f32 %v757, %v856
          %v858 = vpop.f32.mrf.mxu0
          %v859 = vpop.f32.mrf.mxu0
          %v860 = vadd.f32 %v757, %v859
          %v861 = vpop.f32.mrf.mxu0
          %862 = vmatprep.mubr.bf16.mxu0 0
          %863 = vmatmul.mubr.bf16.gmra.mxu0 %v736
          %v864 = vpop.f32.mrf.mxu0
          %v865 = vadd.f32 %v757, %v864
          %v866 = vpop.f32.mrf.mxu0
          %v867 = vpop.f32.mrf.mxu0
          %v868 = vadd.f32 %v757, %v867
          %v869 = vpop.f32.mrf.mxu0
          %870 = vdwg.mxu0
          %v871 = vpack.c.bf16 %v844, %v841
          %v872 = vpack.c.bf16 %v852, %v849
          %v873 = vpack.c.bf16 %v860, %v857
          %v874 = vpack.c.bf16 %v868, %v865
          %v879 = vunpack.c.l.b16 %v871
          %v880 = vunpack.c.h.b16 %v871
          %v881 = vunpack.c.l.b16 %v872
          %v882 = vunpack.c.h.b16 %v872
          %v883 = vunpack.c.l.b16 %v873
          %v884 = vunpack.c.h.b16 %v873
          %v885 = vunpack.c.l.b16 %v874
          %v886 = vunpack.c.h.b16 %v874
          %v887 = vpack.c.b16 %v879, %v879
          %v888 = vpack.c.b16 %v880, %v880
          %v889 = vpack.c.b16 %v881, %v881
          %v890 = vpack.c.b16 %v882, %v882
          %v891 = vpack.c.b16 %v883, %v883
          %v892 = vpack.c.b16 %v884, %v884
          %v893 = vpack.c.b16 %v885, %v885
          %v894 = vpack.c.b16 %v886, %v886
          %903 = vst [vmem:[%s348] sm:$0xf] %v887
          %904 = vst [vmem:[%s348 + $0x4] sm:$0xf] %v888
          %905 = vst [vmem:[%s348 + $0x8] sm:$0xf] %v889
          %906 = vst [vmem:[%s348 + $0xc] sm:$0xf] %v890
          %907 = vst [vmem:[%s348 + $0x10] sm:$0xf] %v891
          %908 = vst [vmem:[%s348 + $0x14] sm:$0xf] %v892
          %909 = vst [vmem:[%s348 + $0x18] sm:$0xf] %v893
          %910 = vst [vmem:[%s348 + $0x1c] sm:$0xf] %v894
        $region72: #{tpu_custom_call.1} parent=43 // pred_fallthru
          _
        %s911 = sand.u32 %s183, 1
        %s912 = scalar_lea.sflag [#allocation5], %s911
        %s913 = sand.u32 %s183, 1
        %s914 = smul.addr %s913, 32
        %s915 = scalar_lea.vmem [#allocation12], %s914
        // Predicated region
        $region73: #{tpu_custom_call.1} parent=43 // pred_check
          %p916 = pneg %p193
        $region74: #{tpu_custom_call.1} parent=43 // pred_check_branch
          %918 = sbr.rel (%p916) target = $region76
        $region75: #{tpu_custom_call.1} parent=43 // pred_region
          %s919 = smul.u32 8, %s29
          %s921 = ssub.s32 512, 512
          %922 = vsyncadd %s912, %s921
          %s923 = smul.addr %s919, 64
          %s924 = scalar_lea.hbm %s6, %s923
          %s925 = sshll.u32 %s915, 4
          %s926 = int_to_ptr.vmem [resolvable:$true] %s925
          %931 = dma.vmem_to_hbm [thread:$0]  %s926, 512, %s924, %s912, 64, 64, 4
        $region76: #{tpu_custom_call.1} parent=43 // pred_fallthru
          _
      $region44: #{tpu_custom_call.1} parent=5 // pred_fallthru
        _
      %p932 = scmp.le.s32.totalorder 2, %s20
      // Predicated region
      $region77: #{tpu_custom_call.1} parent=5 // pred_check
        %p933 = pneg %p932
      $region78: #{tpu_custom_call.1} parent=5 // pred_check_branch
        %935 = sbr.rel (%p933) target = $region80
      $region79: #{tpu_custom_call.1} parent=5 // pred_region
        %s936 = ssub.s32 %s20, 2
        // Predicated region
        $region81: #{tpu_custom_call.1} parent=79 // pred_check
          %p937 = pneg %p199
        $region82: #{tpu_custom_call.1} parent=79 // pred_check_branch
          %939 = sbr.rel (%p937) target = $region84
        $region83: #{tpu_custom_call.1} parent=79 // pred_region
          %s940 = sand.u32 %s184, 1
          %s941 = scalar_lea.sflag [#allocation5], %s940
          %s942 = sand.u32 %s184, 1
          %s943 = smul.addr %s942, 32
          %s944 = scalar_lea.vmem [#allocation12], %s943
          %945 = dma.done %s941, 512
        $region84: #{tpu_custom_call.1} parent=79 // pred_fallthru
          _
      $region80: #{tpu_custom_call.1} parent=5 // pred_fallthru
        _
    $region6: #{tpu_custom_call.1} parent=1 // loop_footer
      %s24 = sadd.s32 1, %s20
    $region7: #{tpu_custom_call.1} parent=1 // loop_footer_branch
      %19 = sbr.rel target = $region3
    $region8: #{tpu_custom_call.1} parent=1 // loop_exit
      _
    %946 = vsyncpa [#allocation4], 1
    %s947 = scalar_lea.sflag [#allocation4], 1
    %948 = vsyncpa %s947, 1
    %949 = vsyncpa [#allocation7], 1
    %950 = vsyncpa [#allocation10], 1
    %951 = vsyncpa [#allocation5], 1
    %s952 = scalar_lea.sflag [#allocation5], 1
    %953 = vsyncpa %s952, 1

</llo_original>
